<compile_context>
chip_gen: v7x
topology: tpu7x:2x2x1
jax: 0.10.0
libtpu: 0.0.40
codegen_flags: <defaults>
</compile_context>

<pallas_src>
import jax
import jax.numpy as jnp
from jax.experimental import pallas as pl
from jax.experimental.pallas import tpu as pltpu


# ----------------------------- kernels ------------------------------------- #

def _sigmoid(h):
    # sigmoid(h) = 0.5 * tanh(0.5 * h) + 0.5 : one EUP push instead of exp + divide.
    return 0.5 * jnp.tanh(0.5 * h) + 0.5


def _hidden_sigmoid_kernel(x_ref, w1_ref, b1_ref, w2_ref, b2_ref, o_ref):
    """Resident-weight path: one grid axis over the batch, weights stay in VMEM."""
    h = jnp.dot(x_ref[...], w1_ref[...], preferred_element_type=jnp.float32)
    s = _sigmoid(h + b1_ref[...])
    out = jnp.dot(s.astype(w2_ref.dtype), w2_ref[...],
                  preferred_element_type=jnp.float32) + b2_ref[...]
    o_ref[...] = out.astype(o_ref.dtype)


def _hidden_sigmoid_h_tiled_kernel(x_ref, w1_ref, b1_ref, w2_ref, b2_ref, o_ref):
    """H-tiled path: grid=(batch tiles, H chunks); accumulate into resident o_ref."""
    j = pl.program_id(1)
    h = jnp.dot(x_ref[...], w1_ref[...], preferred_element_type=jnp.float32)
    s = _sigmoid(h + b1_ref[...])
    part = jnp.dot(s.astype(w2_ref.dtype), w2_ref[...],
                   preferred_element_type=jnp.float32)

    @pl.when(j == 0)
    def _():
        o_ref[...] = jnp.broadcast_to(b2_ref[...], o_ref.shape).astype(o_ref.dtype)

    o_ref[...] += part.astype(o_ref.dtype)


# ----------------------------- helpers -------------------------------------- #

def _round_up(v, m):
    return ((v + m - 1) // m) * m


def _layout_bytes(rows, cols, dtype):
    """VMEM bytes of a (rows, cols) buffer after (sublane, 128-lane) tiling."""
    itemsize = jnp.dtype(dtype).itemsize
    sublane = max(8, 32 // itemsize)          # f32: 8, bf16: 16, int8/fp8: 32
    return _round_up(max(rows, 1), sublane) * _round_up(max(cols, 1), 128) * itemsize


def _divisor_tiles(total, step, cap):
    """Multiples of `step` dividing `total`, descending, capped at `cap`.
    Falls back to [total] (full extent is always a legal block)."""
    cands = []
    t = min(cap, total)
    t -= t % step
    while t >= step:
        if total % t == 0:
            cands.append(t)
        t -= step
    return cands or [total]


def _vmem_budget_bytes():
    """~80% of physical VMEM: ~51 MiB on v7x (64 MiB), ~102 MiB on v5e/v6e (128 MiB)."""
    try:
        vmem = int(pltpu.get_tpu_info().vmem_capacity_bytes)
    except Exception:
        vmem = 0
    if vmem <= 0:
        vmem = 64 << 20  # v7x has the smallest physical VMEM; be conservative.
    return (vmem * 4) // 5


def _num_tensorcores():
    """Best-effort TensorCore count (v7x: 2); defaults to 1 if unknown."""
    try:
        info = pltpu.get_tpu_info()
    except Exception:
        return 1
    for attr in ("num_cores", "core_count", "num_tensorcores", "tensorcores_per_chip"):
        try:
            n = int(getattr(info, attr))
            if n >= 1:
                return n
        except (AttributeError, TypeError, ValueError):
            pass
    return 1


# ----------------------------- wrapper -------------------------------------- #

def hidden_sigmoid(x, w1, b1, w2, b2, *, mxu_dtype=jnp.float32,
                   force_h_tiling=False, h_tile=None):
    """Fused HiddenSigmoid forward pass.

    x: (B, D), w1: (D, H), b1: (1, H) or (H,), w2: (H, O), b2: (1, O) or (O,).
    Returns (B, O) float32.

    mxu_dtype=jnp.bfloat16 halves weight DMA / VMEM (cast once here in the
    wrapper, NOT per grid step in the kernel); bf16 operands will not meet the
    ~1e-4 f32 tolerance used by the demo check.
    """
    compute_dtype = jnp.dtype(mxu_dtype)
    B, D = x.shape
    H = w1.shape[1]
    O = w2.shape[1]

    # Pre-cast MXU operands in the wrapper (not per-step inside the kernel).
    x = x.astype(compute_dtype)
    w1 = w1.astype(compute_dtype)
    w2 = w2.astype(compute_dtype)
    b1 = jnp.asarray(b1, jnp.float32).reshape(1, H)   # biases stay f32 (f32 accum)
    b2 = jnp.asarray(b2, jnp.float32).reshape(1, O)

    # --- Lane-dense hidden dim: pad H up to a multiple of 128. Padded columns
    # produce sigmoid(0)=0.5 which multiplies zero rows of W2 => result
    # unchanged; the (tb, H) intermediate uses the same vregs either way.
    H_pad = _round_up(H, 128)
    if H_pad != H:
        w1 = jnp.zeros((D, H_pad), w1.dtype).at[:, :H].set(w1)
        b1 = jnp.zeros((1, H_pad), b1.dtype).at[:, :H].set(b1)
        w2 = jnp.zeros((H_pad, O), w2.dtype).at[:H, :].set(w2)

    # --- Bandwidth-aware lane-dense output: pad O to 128 only when the HBM
    # write amplification is harmless; otherwise store narrow (masked vst).
    O_pad = _round_up(O, 128)
    pad_output = (O % 128 != 0) and (O_pad <= 2 * O or B * O_pad * 4 <= (4 << 20))
    O_k = O_pad if pad_output else O
    if O_k != O:
        w2 = jnp.zeros((H_pad, O_k), w2.dtype).at[:, :O].set(w2)
        b2 = jnp.zeros((1, O_k), b2.dtype).at[:, :O].set(b2)

    # --- Layout-aware VMEM budgeting (accounts for (8,128) tile padding). ---
    budget = _vmem_budget_bytes()
    num_cores = _num_tensorcores()

    weight_res = (_layout_bytes(D, H_pad, compute_dtype)
                  + _layout_bytes(1, H_pad, jnp.float32)
                  + _layout_bytes(H_pad, O_k, compute_dtype)
                  + _layout_bytes(1, O_k, jnp.float32))

    def stream_bytes(tb_):  # double-buffered x and out tiles
        return 2 * (_layout_bytes(tb_, D, compute_dtype)
                    + _layout_bytes(tb_, O_k, jnp.float32))

    tb_cands = _divisor_tiles(B, 8, B)
    use_h_tiling = force_h_tiling or (weight_res + stream_bytes(tb_cands[-1]) > budget)

    if not use_h_tiling:
        # -------- resident-weight path: single grid axis over the batch ------
        # Weights/biases have a constant block index -> ALWAYS single-buffer
        # them; a second buffer never carries new data (pure VMEM waste).
        tb = None
        if num_cores >= 2:
            for cand in tb_cands:      # prefer >= num_cores grid steps (v7x)
                if B // cand >= num_cores and weight_res + stream_bytes(cand) <= budget:
                    tb = cand
                    break
        if tb is None:
            for cand in tb_cands:      # otherwise: largest tile that fits
                if weight_res + stream_bytes(cand) <= budget:
                    tb = cand
                    break
        if tb is None:
            tb = tb_cands[-1]
        grid_b = B // tb
        footprint = weight_res + stream_bytes(tb)

        def const_spec(shape):
            return pl.BlockSpec(shape, lambda i: (0, 0),
                                pipeline_mode=pl.Buffered(1))

        grid_spec = pl.GridSpec(
            grid=(grid_b,),
            in_specs=[
                pl.BlockSpec((tb, D), lambda i: (i, 0)),   # x (batch-tiled stream)
                const_spec((D, H_pad)),                    # W1 (resident)
                const_spec((1, H_pad)),                    # b1
                const_spec((H_pad, O_k)),                  # W2 (resident)
                const_spec((1, O_k)),                      # b2
            ],
            out_specs=pl.BlockSpec((tb, O_k), lambda i: (i, 0)),
        )
        kernel = _hidden_sigmoid_kernel
        batch_sem = (pltpu.CORE_PARALLEL
                     if (num_cores >= 2 and grid_b >= num_cores)
                     else pltpu.ARBITRARY)
        sems = (batch_sem,)
    else:
        # -------- H-tiled (reduction) path for large hidden dims -------------
        th_cands = _divisor_tiles(H_pad, 128, H_pad)
        if h_tile is not None:
            assert h_tile % 128 == 0 and H_pad % h_tile == 0, \
                "h_tile must be a multiple of 128 dividing the padded hidden dim"
            th_cands = [h_tile]

        def fp_ht(tb_, th_):
            return (stream_bytes(tb_)
                    + 2 * (_layout_bytes(D, th_, compute_dtype)       # streamed,
                           + _layout_bytes(1, th_, jnp.float32)       # double-
                           + _layout_bytes(th_, O_k, compute_dtype))  # buffered
                    + _layout_bytes(1, O_k, jnp.float32))             # b2 (single)

        tb, th = None, None
        for tb_ in _divisor_tiles(B, 8, min(B, 512)):
            for th_ in th_cands:
                if fp_ht(tb_, th_) <= budget:
                    tb, th = tb_, th_
                    break
            if tb is not None:
                break
        if tb is None:
            tb = _divisor_tiles(B, 8, min(B, 512))[-1]
            th = th_cands[-1]
        grid_b = B // tb
        footprint = fp_ht(tb, th)

        grid_spec = pl.GridSpec(
            grid=(grid_b, H_pad // th),
            in_specs=[
                pl.BlockSpec((tb, D), lambda i, j: (i, 0)),      # x (reused over j)
                pl.BlockSpec((D, th), lambda i, j: (0, j)),      # W1 chunk (stream)
                pl.BlockSpec((1, th), lambda i, j: (0, j)),      # b1 chunk
                pl.BlockSpec((th, O_k), lambda i, j: (j, 0)),    # W2 chunk (stream)
                pl.BlockSpec((1, O_k), lambda i, j: (0, 0),
                             pipeline_mode=pl.Buffered(1)),      # b2 (constant)
            ],
            out_specs=pl.BlockSpec((tb, O_k), lambda i, j: (i, 0)),
        )
        kernel = _hidden_sigmoid_h_tiled_kernel
        batch_sem = (pltpu.CORE_PARALLEL
                     if (num_cores >= 2 and grid_b >= num_cores)
                     else pltpu.ARBITRARY)
        sems = (batch_sem, pltpu.ARBITRARY)   # H axis is a reduction

    if footprint > budget:
        raise ValueError(
            f"HiddenSigmoid needs ~{footprint >> 20} MiB of VMEM but only "
            f"~{budget >> 20} MiB is usable on this TPU generation; use "
            f"mxu_dtype=jnp.bfloat16 or reduce hidden/output dims.")

    compiler_kwargs = dict(dimension_semantics=sems)
    if footprint > (16 << 20):  # above the smallest (v5e) default scoped limit
        compiler_kwargs["vmem_limit_bytes"] = int(budget)

    out = pl.pallas_call(
        kernel,
        out_shape=jax.ShapeDtypeStruct((B, O_k), jnp.float32),
        grid_spec=grid_spec,
        compiler_params=pltpu.CompilerParams(**compiler_kwargs),
    )(x, w1, b1, w2, b2)

    return out[:, :O] if O_k != O else out


def reference(x, w1, b1, w2, b2):
    h = jax.nn.sigmoid(x @ w1 + b1.reshape(1, -1))
    return h @ w2 + b2.reshape(1, -1)


# ----------------------------- demo ------------------------------------------ #

if __name__ == "__main__":
    # Small shapes consistent with HiddenSigmoid(input_dim, hidden_dim, output_dim).
    batch, input_dim, hidden_dim, output_dim = 64, 16, 32, 2

    key = jax.random.PRNGKey(0)
    kx, k1, k2, k3, k4 = jax.random.split(key, 5)

    x = jax.random.normal(kx, (batch, input_dim), dtype=jnp.float32)

    lim1 = 1.0 / jnp.sqrt(input_dim)
    lim2 = 1.0 / jnp.sqrt(hidden_dim)
    w1 = jax.random.uniform(k1, (input_dim, hidden_dim), jnp.float32, -lim1, lim1)
    b1 = jax.random.uniform(k2, (1, hidden_dim), jnp.float32, -lim1, lim1)
    w2 = jax.random.uniform(k3, (hidden_dim, output_dim), jnp.float32, -lim2, lim2)
    b2 = jax.random.uniform(k4, (1, output_dim), jnp.float32, -lim2, lim2)

    # Resident-weight path (the common case).
    out = jax.block_until_ready(hidden_sigmoid(x, w1, b1, w2, b2))
    ref = reference(x, w1, b1, w2, b2)
    assert out.shape == (batch, output_dim)
    # f32 MXU vs the module's f64: tolerance reflects f32 accumulation order.
    assert jnp.allclose(out, ref, atol=1e-4, rtol=1e-4)

    # Also exercise the H-tiled reduction path (forced; 2 hidden chunks of 128).
    hidden2 = 256
    lim2b = 1.0 / jnp.sqrt(hidden2)
    w1b = jax.random.uniform(k1, (input_dim, hidden2), jnp.float32, -lim1, lim1)
    b1b = jax.random.uniform(k2, (1, hidden2), jnp.float32, -lim1, lim1)
    w2b = jax.random.uniform(k3, (hidden2, output_dim), jnp.float32, -lim2b, lim2b)
    b2b = jax.random.uniform(k4, (1, output_dim), jnp.float32, -lim2b, lim2b)
    out2 = jax.block_until_ready(
        hidden_sigmoid(x, w1b, b1b, w2b, b2b, force_h_tiling=True, h_tile=128))
    ref2 = reference(x, w1b, b1b, w2b, b2b)
    assert out2.shape == (batch, output_dim)
    assert jnp.allclose(out2, ref2, atol=1e-4, rtol=1e-4)

    print("KERNEL_OK")
</pallas_src>

<mosaic_0001>
module attributes {stable_mosaic.version = 11 : i64} {
  func.func @_hidden_sigmoid_kernel(%arg0: i32, %arg1: memref<64x16xf32, #tpu.memory_space<vmem>>, %arg2: memref<16x128xf32, #tpu.memory_space<vmem>>, %arg3: memref<1x128xf32, #tpu.memory_space<vmem>>, %arg4: memref<128x128xf32, #tpu.memory_space<vmem>>, %arg5: memref<1x128xf32, #tpu.memory_space<vmem>>, %arg6: memref<64x128xf32, #tpu.memory_space<vmem>>) attributes {dimension_semantics = [#tpu.dimension_semantics<arbitrary>], iteration_bounds = array<i64: 1>, scalar_prefetch = 0 : i64, scratch_operands = 0 : i64, tpu.core_type = #tpu.core_type<tc>, window_params = [{transform_indices = @transform_0, window_bounds = array<i64: 64, 16>}, {pipeline_mode = #tpu.pipeline_mode<synchronous>, transform_indices = @transform_1, window_bounds = array<i64: 16, 128>}, {pipeline_mode = #tpu.pipeline_mode<synchronous>, transform_indices = @transform_2, window_bounds = array<i64: 1, 128>}, {pipeline_mode = #tpu.pipeline_mode<synchronous>, transform_indices = @transform_3, window_bounds = array<i64: 128, 128>}, {pipeline_mode = #tpu.pipeline_mode<synchronous>, transform_indices = @transform_4, window_bounds = array<i64: 1, 128>}, {transform_indices = @transform_5, window_bounds = array<i64: 64, 128>}]} {
    %c0 = arith.constant 0 : index
    %c0_0 = arith.constant 0 : index
    %0 = vector.load %arg1[%c0, %c0_0] : memref<64x16xf32, #tpu.memory_space<vmem>>, vector<64x16xf32>
    %c0_1 = arith.constant 0 : index
    %c0_2 = arith.constant 0 : index
    %1 = vector.load %arg2[%c0_1, %c0_2] : memref<16x128xf32, #tpu.memory_space<vmem>>, vector<16x128xf32>
    %cst = arith.constant dense<0.000000e+00> : vector<64x128xf32>
    %2 = tpu.matmul %0, %1, %cst {dimension_numbers = #tpu.dot_dimension_numbers<[1], [0], [0], [1], [0, 0, 1, 1], [], []>} : vector<64x16xf32>, vector<16x128xf32>, vector<64x128xf32> -> vector<64x128xf32>
    %c0_3 = arith.constant 0 : index
    %c0_4 = arith.constant 0 : index
    %3 = vector.load %arg3[%c0_3, %c0_4] : memref<1x128xf32, #tpu.memory_space<vmem>>, vector<1x128xf32>
    %4 = vector.broadcast %3 : vector<1x128xf32> to vector<64x128xf32>
    %5 = arith.addf %2, %4 : vector<64x128xf32>
    %cst_5 = arith.constant 5.000000e-01 : f32
    %6 = vector.broadcast %cst_5 : f32 to vector<64x128xf32>
    %7 = arith.mulf %6, %5 : vector<64x128xf32>
    %8 = math.tanh %7 : vector<64x128xf32>
    %cst_6 = arith.constant 5.000000e-01 : f32
    %9 = vector.broadcast %cst_6 : f32 to vector<64x128xf32>
    %10 = arith.mulf %9, %8 : vector<64x128xf32>
    %cst_7 = arith.constant 5.000000e-01 : f32
    %11 = vector.broadcast %cst_7 : f32 to vector<64x128xf32>
    %12 = arith.addf %10, %11 : vector<64x128xf32>
    %c0_8 = arith.constant 0 : index
    %c0_9 = arith.constant 0 : index
    %13 = vector.load %arg4[%c0_8, %c0_9] : memref<128x128xf32, #tpu.memory_space<vmem>>, vector<128x128xf32>
    %cst_10 = arith.constant dense<0.000000e+00> : vector<64x128xf32>
    %14 = tpu.matmul %12, %13, %cst_10 {dimension_numbers = #tpu.dot_dimension_numbers<[1], [0], [0], [1], [0, 0, 1, 1], [], []>} : vector<64x128xf32>, vector<128x128xf32>, vector<64x128xf32> -> vector<64x128xf32>
    %c0_11 = arith.constant 0 : index
    %c0_12 = arith.constant 0 : index
    %15 = vector.load %arg5[%c0_11, %c0_12] : memref<1x128xf32, #tpu.memory_space<vmem>>, vector<1x128xf32>
    %16 = vector.broadcast %15 : vector<1x128xf32> to vector<64x128xf32>
    %17 = arith.addf %14, %16 : vector<64x128xf32>
    %c0_13 = arith.constant 0 : index
    %c0_14 = arith.constant 0 : index
    %18 = vector.load %arg6[%c0_13, %c0_14] : memref<64x128xf32, #tpu.memory_space<vmem>>, vector<64x128xf32>
    tpu.vector_store %arg6[%c0_13, %c0_14], %17 {strides = array<i32>} : memref<64x128xf32, #tpu.memory_space<vmem>>, vector<64x128xf32>,
    return
  }
  func.func @transform_0(%arg0: i32) -> (i32, i32) {
    %c0_i32 = arith.constant 0 : i32
    %c0_i32_0 = arith.constant 0 : i32
    return %arg0, %c0_i32 : i32, i32
  }
  func.func @transform_1(%arg0: i32) -> (i32, i32) {
    %c0_i32 = arith.constant 0 : i32
    %c0_i32_0 = arith.constant 0 : i32
    %c0_i32_1 = arith.constant 0 : i32
    return %c0_i32, %c0_i32_0 : i32, i32
  }
  func.func @transform_2(%arg0: i32) -> (i32, i32) {
    %c0_i32 = arith.constant 0 : i32
    %c0_i32_0 = arith.constant 0 : i32
    %c0_i32_1 = arith.constant 0 : i32
    return %c0_i32, %c0_i32_0 : i32, i32
  }
  func.func @transform_3(%arg0: i32) -> (i32, i32) {
    %c0_i32 = arith.constant 0 : i32
    %c0_i32_0 = arith.constant 0 : i32
    %c0_i32_1 = arith.constant 0 : i32
    return %c0_i32, %c0_i32_0 : i32, i32
  }
  func.func @transform_4(%arg0: i32) -> (i32, i32) {
    %c0_i32 = arith.constant 0 : i32
    %c0_i32_0 = arith.constant 0 : i32
    %c0_i32_1 = arith.constant 0 : i32
    return %c0_i32, %c0_i32_0 : i32, i32
  }
  func.func @transform_5(%arg0: i32) -> (i32, i32) {
    %c0_i32 = arith.constant 0 : i32
    %c0_i32_0 = arith.constant 0 : i32
    return %arg0, %c0_i32 : i32, i32
  }
}

</mosaic_0001>

<llo_original>
// kernel: tpu_custom_call.1
$region0: #{tpu_custom_call.1}
  #allocation0 [shape = 'u32[]', space=smem, size = 0x4, offset = 0x4, fixed_abs, tag = 'smem constant byte address 0x4 - core index']
  #allocation1 [shape = 'u32[144,128]{1,0:T(1,128)}', space=vmem, size = 0x12000, scoped, tag = 'internal scratch']
  %s0 = inlined_call_operand.vmem [shape: f32[64,16], index: 0, kind: input, shape index: {}]
  %s1 = inlined_call_operand.vmem [shape: f32[16,128], index: 1, kind: input, shape index: {}]
  %s2 = inlined_call_operand.vmem [shape: f32[1,128], index: 2, kind: input, shape index: {}]
  %s3 = inlined_call_operand.hbm [shape: f32[128,128], index: 3, kind: input, shape index: {}]
  %s4 = inlined_call_operand.vmem [shape: f32[1,128], index: 4, kind: input, shape index: {}]
  %s5 = inlined_call_operand.hbm [shape: f32[64,128], index: 5, kind: output, shape index: {}]
  %s6 = sld [smem:[#allocation0]]
  $region34: #{tpu_custom_call.1} parent=0
    _
  %s8 = ssub.s32 1, %s6
  %s9 = scalar_select 0, %s8, %s6
  $region1: #{tpu_custom_call.1} parent=0
    #allocation2 [shape = 'u8[65536]{0}', space=vmem, size = 0x10000, scoped, tag = 'input window, operand 3, single buffered']
    #allocation3 [shape = 's32[1]{0}', space=sflag, size = 0x4, scoped, tag = 'scoped memory for tpu_custom_call.1']
    #allocation4 [shape = 's32[1]{0}', space=sflag, size = 0x4, scoped, tag = 'scoped memory for tpu_custom_call.1']
    #allocation5 [shape = 'u8[32768]{0}', space=vmem, size = 0x8000, scoped, tag = 'output window, operand 0, single buffered']
    %10 = vsyncpa [#allocation3], 0
    %11 = vsyncpa [#allocation4], 0
    // Predicated region
    $region2: #{tpu_custom_call.1} parent=1 // pred_check
      _
    $region3: #{tpu_custom_call.1} parent=1 // pred_check_branch
      %13 = sbr.rel (0) target = $region5
    $region4: #{tpu_custom_call.1} parent=1 // pred_region
      _
    $region5: #{tpu_custom_call.1} parent=1 // pred_fallthru
      _
    // Predicated region
    $region6: #{tpu_custom_call.1} parent=1 // pred_check
      _
    $region7: #{tpu_custom_call.1} parent=1 // pred_check_branch
      %15 = sbr.rel (0) target = $region9
    $region8: #{tpu_custom_call.1} parent=1 // pred_region
      _
    $region9: #{tpu_custom_call.1} parent=1 // pred_fallthru
      _
    // Predicated region
    $region10: #{tpu_custom_call.1} parent=1 // pred_check
      _
    $region11: #{tpu_custom_call.1} parent=1 // pred_check_branch
      %17 = sbr.rel (0) target = $region13
    $region12: #{tpu_custom_call.1} parent=1 // pred_region
      _
    $region13: #{tpu_custom_call.1} parent=1 // pred_fallthru
      _
    // Predicated region
    $region14: #{tpu_custom_call.1} parent=1 // pred_check
      _
    $region15: #{tpu_custom_call.1} parent=1 // pred_check_branch
      %19 = sbr.rel (0) target = $region17
    $region16: #{tpu_custom_call.1} parent=1 // pred_region
      %s21 = ssub.s32 2048, 2048
      %22 = vsyncadd [#allocation3], %s21
      %s23 = sshll.u32 [#allocation2], 4
      %s24 = int_to_ptr.vmem [resolvable:$true] %s23
      %29 = dma.hbm_to_vmem [thread:$0]  %s3, 2048, %s24, [#allocation3], 128, 128, 8
    $region17: #{tpu_custom_call.1} parent=1 // pred_fallthru
      _
    // Predicated region
    $region18: #{tpu_custom_call.1} parent=1 // pred_check
      _
    $region19: #{tpu_custom_call.1} parent=1 // pred_check_branch
      %31 = sbr.rel (0) target = $region21
    $region20: #{tpu_custom_call.1} parent=1 // pred_region
      _
    $region21: #{tpu_custom_call.1} parent=1 // pred_fallthru
      _
    // Predicated region
    $region22: #{tpu_custom_call.1} parent=1 // pred_check
      _
    $region23: #{tpu_custom_call.1} parent=1 // pred_check_branch
      %33 = sbr.rel (0) target = $region25
    $region24: #{tpu_custom_call.1} parent=1 // pred_region
      %34 = dma.done [#allocation3], 2048
    $region25: #{tpu_custom_call.1} parent=1 // pred_fallthru
      _
    %v35 = vld [vmem:[%s0] sm:$0xff]
    %v36 = vld [vmem:[%s0 + $0x8] sm:$0xff]
    %v37 = vld [vmem:[%s0 + $0x10] sm:$0xff]
    %v38 = vld [vmem:[%s0 + $0x18] sm:$0xff]
    %v39 = vld [vmem:[%s0 + $0x20] sm:$0xff]
    %v40 = vld [vmem:[%s0 + $0x28] sm:$0xff]
    %v41 = vld [vmem:[%s0 + $0x30] sm:$0xff]
    %v42 = vld [vmem:[%s0 + $0x38] sm:$0xff]
    %v43 = vld [vmem:[%s1] sm:$0xff]
    %v44 = vld [vmem:[%s1 + $0x8] sm:$0xff]
    %v45 = vld [vmem:[%s2] sm:$0x1]
    %v47 = vlaneseq
    %v48 = vshrl.u32 %v47, 7
    %v49 = vsub.s32 0, %v48
    %v50 = vrot.slane %v45, %v49
    %vm52 = vcmask 130048
    %v54 = vsel %vm52, %v35, 0
    %v57 = vsel %vm52, %v36, 0
    %v60 = vsel %vm52, %v37, 0
    %v63 = vsel %vm52, %v38, 0
    %v66 = vsel %vm52, %v39, 0
    %v69 = vsel %vm52, %v40, 0
    %v72 = vsel %vm52, %v41, 0
    %v75 = vsel %vm52, %v42, 0
    %77 = vmatprep.subr.mxu0 0.0
    %78 = vmatpush1.msra.mxu0 %v43
    %79 = vmatprep.subr.mxu0 0.0
    %80 = vmatpush1.msra.mxu0 %v44
    %81 = vmatprep.subr.mxu0 0.0
    %82 = vmatpush1.msra.mxu0 0.0
    %83 = vmatprep.subr.mxu0 0.0
    %84 = vmatpush1.msra.mxu0 0.0
    %85 = vmatprep.subr.mxu0 0.0
    %86 = vmatpush1.msra.mxu0 0.0
    %87 = vmatprep.subr.mxu0 0.0
    %88 = vmatpush1.msra.mxu0 0.0
    %89 = vmatprep.subr.mxu0 0.0
    %90 = vmatpush1.msra.mxu0 0.0
    %91 = vmatprep.subr.mxu0 0.0
    %92 = vmatpush1.msra.mxu0 0.0
    %93 = vmatprep.subr.mxu0 0.0
    %94 = vmatpush1.msra.mxu0 0.0
    %95 = vmatprep.subr.mxu0 0.0
    %96 = vmatpush1.msra.mxu0 0.0
    %97 = vmatprep.subr.mxu0 0.0
    %98 = vmatpush1.msra.mxu0 0.0
    %99 = vmatprep.subr.mxu0 0.0
    %100 = vmatpush1.msra.mxu0 0.0
    %101 = vmatprep.subr.mxu0 0.0
    %102 = vmatpush1.msra.mxu0 0.0
    %103 = vmatprep.subr.mxu0 0.0
    %104 = vmatpush1.msra.mxu0 0.0
    %105 = vmatprep.subr.mxu0 0.0
    %106 = vmatpush1.msra.mxu0 0.0
    %107 = vmatprep.subr.mxu0 0.0
    %108 = vmatpush1.msra.mxu0 0.0
    %109 = vmatprep.subr.mxu0 0.0
    %110 = vmatpush1.msra.mxu0 0.0
    %111 = vmatprep.subr.mxu0 0.0
    %112 = vmatpush1.msra.mxu0 0.0
    %113 = vmatprep.subr.mxu0 0.0
    %114 = vmatpush1.msra.mxu0 0.0
    %115 = vmatprep.subr.mxu0 0.0
    %116 = vmatpush1.msra.mxu0 0.0
    %117 = vmatprep.subr.mxu0 0.0
    %118 = vmatpush1.msra.mxu0 0.0
    %119 = vmatprep.subr.mxu0 0.0
    %120 = vmatpush1.msra.mxu0 0.0
    %121 = vmatprep.subr.mxu0 0.0
    %122 = vmatpush1.msra.mxu0 0.0
    %123 = vmatprep.subr.mxu0 0.0
    %124 = vmatpush1.msra.mxu0 0.0
    %125 = vmatprep.subr.mxu0 0.0
    %126 = vmatpush1.msra.mxu0 0.0
    %127 = vmatprep.subr.mxu0 0.0
    %128 = vmatpush1.msra.mxu0 0.0
    %129 = vmatprep.subr.mxu0 0.0
    %130 = vmatpush1.msra.mxu0 0.0
    %131 = vmatprep.subr.mxu0 0.0
    %132 = vmatpush1.msra.mxu0 0.0
    %133 = vmatprep.subr.mxu0 0.0
    %134 = vmatpush1.msra.mxu0 0.0
    %135 = vmatprep.subr.mxu0 0.0
    %136 = vmatpush1.msra.mxu0 0.0
    %137 = vmatprep.subr.mxu0 0.0
    %138 = vmatpush1.msra.mxu0 0.0
    %139 = vmatprep.subr.mxu0 0.0
    %140 = vmatpush1.msra.mxu0 0.0
    %141 = vmatprep.mubr.f32.mxu0 0.0
    %142 = vmatmul.mubr.f32.gmra.mrb[0].mxu0 %v54
    %v143 = vpop.f32.mrb[0].mxu0
    %v144 = vadd.f32 %v50, %v143
    %v145 = vpop.f32.mrb[0].mxu0
    %146 = vmatprep.mubr.f32.mxu0 0.0
    %147 = vmatmul.mubr.f32.gmra.mrb[0].mxu0 %v57
    %v148 = vpop.f32.mrb[0].mxu0
    %v149 = vadd.f32 %v50, %v148
    %v150 = vpop.f32.mrb[0].mxu0
    %151 = vmatprep.mubr.f32.mxu0 0.0
    %152 = vmatmul.mubr.f32.gmra.mrb[0].mxu0 %v60
    %v153 = vpop.f32.mrb[0].mxu0
    %v154 = vadd.f32 %v50, %v153
    %v155 = vpop.f32.mrb[0].mxu0
    %156 = vmatprep.mubr.f32.mxu0 0.0
    %157 = vmatmul.mubr.f32.gmra.mrb[0].mxu0 %v63
    %v158 = vpop.f32.mrb[0].mxu0
    %v159 = vadd.f32 %v50, %v158
    %v160 = vpop.f32.mrb[0].mxu0
    %161 = vmatprep.mubr.f32.mxu0 0.0
    %162 = vmatmul.mubr.f32.gmra.mrb[0].mxu0 %v66
    %v163 = vpop.f32.mrb[0].mxu0
    %v164 = vadd.f32 %v50, %v163
    %v165 = vpop.f32.mrb[0].mxu0
    %166 = vmatprep.mubr.f32.mxu0 0.0
    %167 = vmatmul.mubr.f32.gmra.mrb[0].mxu0 %v69
    %v168 = vpop.f32.mrb[0].mxu0
    %v169 = vadd.f32 %v50, %v168
    %v170 = vpop.f32.mrb[0].mxu0
    %171 = vmatprep.mubr.f32.mxu0 0.0
    %172 = vmatmul.mubr.f32.gmra.mrb[0].mxu0 %v72
    %v173 = vpop.f32.mrb[0].mxu0
    %v174 = vadd.f32 %v50, %v173
    %v175 = vpop.f32.mrb[0].mxu0
    %176 = vmatprep.mubr.f32.mxu0 0.0
    %177 = vmatmul.mubr.f32.gmra.mrb[0].mxu0 %v75
    %v178 = vpop.f32.mrb[0].mxu0
    %v179 = vadd.f32 %v50, %v178
    %v180 = vpop.f32.mrb[0].mxu0
    %181 = vdwg.mxu0
    %v182 = vmul.f32 %v144, 0.5
    %v183 = vmul.f32 %v149, 0.5
    %v184 = vmul.f32 %v154, 0.5
    %v185 = vmul.f32 %v159, 0.5
    %v186 = vmul.f32 %v164, 0.5
    %v187 = vmul.f32 %v169, 0.5
    %v188 = vmul.f32 %v174, 0.5
    %v189 = vmul.f32 %v179, 0.5
    %v190 = vtanh.pop %v182
    %v191 = vtanh.pop %v183
    %v192 = vtanh.pop %v184
    %v193 = vtanh.pop %v185
    %v194 = vtanh.pop %v186
    %v195 = vtanh.pop %v187
    %v196 = vtanh.pop %v188
    %v197 = vtanh.pop %v189
    %v198 = vmul.f32 %v190, 0.5
    %v199 = vmul.f32 %v191, 0.5
    %v200 = vmul.f32 %v192, 0.5
    %v201 = vmul.f32 %v193, 0.5
    %v202 = vmul.f32 %v194, 0.5
    %v203 = vmul.f32 %v195, 0.5
    %v204 = vmul.f32 %v196, 0.5
    %v205 = vmul.f32 %v197, 0.5
    %v206 = vadd.f32 %v198, 0.5
    %v207 = vadd.f32 %v199, 0.5
    %v208 = vadd.f32 %v200, 0.5
    %v209 = vadd.f32 %v201, 0.5
    %v210 = vadd.f32 %v202, 0.5
    %v211 = vadd.f32 %v203, 0.5
    %v212 = vadd.f32 %v204, 0.5
    %v213 = vadd.f32 %v205, 0.5
    %v214 = vld [vmem:[#allocation2] sm:$0xff]
    %v215 = vld [vmem:[#allocation2 + $0x8] sm:$0xff]
    %v216 = vld [vmem:[#allocation2 + $0x10] sm:$0xff]
    %v217 = vld [vmem:[#allocation2 + $0x18] sm:$0xff]
    %v218 = vld [vmem:[#allocation2 + $0x20] sm:$0xff]
    %v219 = vld [vmem:[#allocation2 + $0x28] sm:$0xff]
    %v220 = vld [vmem:[#allocation2 + $0x30] sm:$0xff]
    %v221 = vld [vmem:[#allocation2 + $0x38] sm:$0xff]
    %v222 = vld [vmem:[#allocation2 + $0x40] sm:$0xff]
    %v223 = vld [vmem:[#allocation2 + $0x48] sm:$0xff]
    %v224 = vld [vmem:[#allocation2 + $0x50] sm:$0xff]
    %v225 = vld [vmem:[#allocation2 + $0x58] sm:$0xff]
    %v226 = vld [vmem:[#allocation2 + $0x60] sm:$0xff]
    %v227 = vld [vmem:[#allocation2 + $0x68] sm:$0xff]
    %v228 = vld [vmem:[#allocation2 + $0x70] sm:$0xff]
    %v229 = vld [vmem:[#allocation2 + $0x78] sm:$0xff]
    %v230 = vld [vmem:[%s4] sm:$0x1]
    %v232 = vlaneseq
    %v233 = vshrl.u32 %v232, 7
    %v234 = vsub.s32 0, %v233
    %v235 = vrot.slane %v230, %v234
    %237 = vmatprep.subr.mxu0 0.0
    %238 = vmatpush1.msra.mxu0 %v214
    %239 = vmatprep.subr.mxu0 0.0
    %240 = vmatpush1.msra.mxu0 %v215
    %241 = vmatprep.subr.mxu0 0.0
    %242 = vmatpush1.msra.mxu0 %v216
    %243 = vmatprep.subr.mxu0 0.0
    %244 = vmatpush1.msra.mxu0 %v217
    %245 = vmatprep.subr.mxu0 0.0
    %246 = vmatpush1.msra.mxu0 %v218
    %247 = vmatprep.subr.mxu0 0.0
    %248 = vmatpush1.msra.mxu0 %v219
    %249 = vmatprep.subr.mxu0 0.0
    %250 = vmatpush1.msra.mxu0 %v220
    %251 = vmatprep.subr.mxu0 0.0
    %252 = vmatpush1.msra.mxu0 %v221
    %253 = vmatprep.subr.mxu0 0.0
    %254 = vmatpush1.msra.mxu0 %v222
    %255 = vmatprep.subr.mxu0 0.0
    %256 = vmatpush1.msra.mxu0 %v223
    %257 = vmatprep.subr.mxu0 0.0
    %258 = vmatpush1.msra.mxu0 %v224
    %259 = vmatprep.subr.mxu0 0.0
    %260 = vmatpush1.msra.mxu0 %v225
    %261 = vmatprep.subr.mxu0 0.0
    %262 = vmatpush1.msra.mxu0 %v226
    %263 = vmatprep.subr.mxu0 0.0
    %264 = vmatpush1.msra.mxu0 %v227
    %265 = vmatprep.subr.mxu0 0.0
    %266 = vmatpush1.msra.mxu0 %v228
    %267 = vmatprep.subr.mxu0 0.0
    %268 = vmatpush1.msra.mxu0 %v229
    %269 = vmatprep.subr.mxu0 0.0
    %270 = vmatpush1.msra.mxu0 0.0
    %271 = vmatprep.subr.mxu0 0.0
    %272 = vmatpush1.msra.mxu0 0.0
    %273 = vmatprep.subr.mxu0 0.0
    %274 = vmatpush1.msra.mxu0 0.0
    %275 = vmatprep.subr.mxu0 0.0
    %276 = vmatpush1.msra.mxu0 0.0
    %277 = vmatprep.subr.mxu0 0.0
    %278 = vmatpush1.msra.mxu0 0.0
    %279 = vmatprep.subr.mxu0 0.0
    %280 = vmatpush1.msra.mxu0 0.0
    %281 = vmatprep.subr.mxu0 0.0
    %282 = vmatpush1.msra.mxu0 0.0
    %283 = vmatprep.subr.mxu0 0.0
    %284 = vmatpush1.msra.mxu0 0.0
    %285 = vmatprep.subr.mxu0 0.0
    %286 = vmatpush1.msra.mxu0 0.0
    %287 = vmatprep.subr.mxu0 0.0
    %288 = vmatpush1.msra.mxu0 0.0
    %289 = vmatprep.subr.mxu0 0.0
    %290 = vmatpush1.msra.mxu0 0.0
    %291 = vmatprep.subr.mxu0 0.0
    %292 = vmatpush1.msra.mxu0 0.0
    %293 = vmatprep.subr.mxu0 0.0
    %294 = vmatpush1.msra.mxu0 0.0
    %295 = vmatprep.subr.mxu0 0.0
    %296 = vmatpush1.msra.mxu0 0.0
    %297 = vmatprep.subr.mxu0 0.0
    %298 = vmatpush1.msra.mxu0 0.0
    %299 = vmatprep.subr.mxu0 0.0
    %300 = vmatpush1.msra.mxu0 0.0
    %301 = vmatprep.mubr.f32.mxu0 0.0
    %302 = vmatmul.mubr.f32.gmra.mrb[0].mxu0 %v206
    %v303 = vpop.f32.mrb[0].mxu0
    %v304 = vadd.f32 %v235, %v303
    %v305 = vpop.f32.mrb[0].mxu0
    %306 = vmatprep.mubr.f32.mxu0 0.0
    %307 = vmatmul.mubr.f32.gmra.mrb[0].mxu0 %v207
    %v308 = vpop.f32.mrb[0].mxu0
    %v309 = vadd.f32 %v235, %v308
    %v310 = vpop.f32.mrb[0].mxu0
    %311 = vmatprep.mubr.f32.mxu0 0.0
    %312 = vmatmul.mubr.f32.gmra.mrb[0].mxu0 %v208
    %v313 = vpop.f32.mrb[0].mxu0
    %v314 = vadd.f32 %v235, %v313
    %v315 = vpop.f32.mrb[0].mxu0
    %316 = vmatprep.mubr.f32.mxu0 0.0
    %317 = vmatmul.mubr.f32.gmra.mrb[0].mxu0 %v209
    %v318 = vpop.f32.mrb[0].mxu0
    %v319 = vadd.f32 %v235, %v318
    %v320 = vpop.f32.mrb[0].mxu0
    %321 = vmatprep.mubr.f32.mxu0 0.0
    %322 = vmatmul.mubr.f32.gmra.mrb[0].mxu0 %v210
    %v323 = vpop.f32.mrb[0].mxu0
    %v324 = vadd.f32 %v235, %v323
    %v325 = vpop.f32.mrb[0].mxu0
    %326 = vmatprep.mubr.f32.mxu0 0.0
    %327 = vmatmul.mubr.f32.gmra.mrb[0].mxu0 %v211
    %v328 = vpop.f32.mrb[0].mxu0
    %v329 = vadd.f32 %v235, %v328
    %v330 = vpop.f32.mrb[0].mxu0
    %331 = vmatprep.mubr.f32.mxu0 0.0
    %332 = vmatmul.mubr.f32.gmra.mrb[0].mxu0 %v212
    %v333 = vpop.f32.mrb[0].mxu0
    %v334 = vadd.f32 %v235, %v333
    %v335 = vpop.f32.mrb[0].mxu0
    %336 = vmatprep.mubr.f32.mxu0 0.0
    %337 = vmatmul.mubr.f32.gmra.mrb[0].mxu0 %v213
    %v338 = vpop.f32.mrb[0].mxu0
    %v339 = vadd.f32 %v235, %v338
    %v340 = vpop.f32.mrb[0].mxu0
    %341 = vdwg.mxu0
    %342 = vst [vmem:[#allocation5] sm:$0xff] %v304
    %343 = vst [vmem:[#allocation5 + $0x8] sm:$0xff] %v309
    %344 = vst [vmem:[#allocation5 + $0x10] sm:$0xff] %v314
    %345 = vst [vmem:[#allocation5 + $0x18] sm:$0xff] %v319
    %346 = vst [vmem:[#allocation5 + $0x20] sm:$0xff] %v324
    %347 = vst [vmem:[#allocation5 + $0x28] sm:$0xff] %v329
    %348 = vst [vmem:[#allocation5 + $0x30] sm:$0xff] %v334
    %349 = vst [vmem:[#allocation5 + $0x38] sm:$0xff] %v339
    // Predicated region
    $region26: #{tpu_custom_call.1} parent=1 // pred_check
      _
    $region27: #{tpu_custom_call.1} parent=1 // pred_check_branch
      %351 = sbr.rel (0) target = $region29
    $region28: #{tpu_custom_call.1} parent=1 // pred_region
      %s353 = ssub.s32 1024, 1024
      %354 = vsyncadd [#allocation4], %s353
      %s355 = sshll.u32 [#allocation5], 4
      %s356 = int_to_ptr.vmem [resolvable:$true] %s355
      %361 = dma.vmem_to_hbm [thread:$0]  %s356, 1024, %s5, [#allocation4], 128, 128, 8
    $region29: #{tpu_custom_call.1} parent=1 // pred_fallthru
      _
    // Predicated region
    $region30: #{tpu_custom_call.1} parent=1 // pred_check
      _
    $region31: #{tpu_custom_call.1} parent=1 // pred_check_branch
      %363 = sbr.rel (0) target = $region33
    $region32: #{tpu_custom_call.1} parent=1 // pred_region
      %364 = dma.done [#allocation4], 1024
    $region33: #{tpu_custom_call.1} parent=1 // pred_fallthru
      _
    %365 = vsyncpa [#allocation3], 1
    %366 = vsyncpa [#allocation4], 1

</llo_original>
